<compile_context>
chip_gen: v5e
topology: v5e:2x2
jax: 0.10.0
libtpu: 0.0.40
codegen_flags: <defaults>
</compile_context>

<pallas_src>
import functools
from typing import List, Optional, Sequence, Tuple

import jax
import jax.numpy as jnp
from jax.experimental import pallas as pl
from jax.experimental.pallas import tpu as pltpu

LANE = 128
SUBLANE = 8


def _round_up(x: int, m: int) -> int:
    return (x + m - 1) // m * m


def _make_fused_mlp_kernel(layer_meta: Tuple[Tuple[bool, bool], ...]):
    """Build a kernel computing all layers in one body.

    layer_meta[i] = (has_bias, apply_relu) for layer i.
    Ref order: x_ref, then per layer: w_ref (+ b_ref if has_bias), then o_ref.
    """

    def kernel(*refs):
        it = iter(refs)
        acc = next(it)[...].astype(jnp.float32)            # (tile_m, K0)
        for has_bias, apply_relu in layer_meta:
            w = next(it)[...]                               # already compute_dtype
            acc = jnp.dot(acc.astype(w.dtype), w,
                          preferred_element_type=jnp.float32)
            if has_bias:
                acc = acc + next(it)[...].astype(jnp.float32)   # (1, N) broadcast
            if apply_relu:
                acc = jnp.maximum(acc, 0.0)
        o_ref = next(it)
        o_ref[...] = acc.astype(o_ref.dtype)

    return kernel


def _choose_tile_m(M: int, tile_m: int, min_split_rows: int = 1024) -> int:
    """Pick a batch tile: one step for small M, >=2 steps for large M (v7x 2-TC)."""
    tm = min(tile_m, _round_up(M, SUBLANE))
    if M >= min_split_rows and pl.cdiv(M, tm) < 2:
        tm = _round_up(pl.cdiv(M, 2), SUBLANE)
    return tm


def fused_mlp_forward(x: jax.Array,
                      weights: Sequence[jax.Array],
                      biases: Sequence[Optional[jax.Array]],
                      layer_meta: Tuple[Tuple[bool, bool], ...],
                      *,
                      tile_m: int = 2048,
                      compute_dtype=jnp.float32) -> jax.Array:
    """Whole-MLP forward in one pallas_call.

    x:          (M, K0) float32
    weights[i]: (K_i, N_i)  (= pytorch W.T)
    biases[i]:  (1, N_i) or None
    compute_dtype: dtype fed to the MXU (f32 exact, bf16 for v6e/v7x full rate);
                   accumulation and the bias+ReLU epilogue are always f32.
    """
    M, K0 = x.shape
    n_out = weights[-1].shape[1]

    # Weights are tiny (<~50 KiB total); cast once outside the kernel body.
    weights = [w.astype(compute_dtype) for w in weights]

    tm = _choose_tile_m(M, tile_m)
    grid = (pl.cdiv(M, tm),)   # ragged last block handled by Pallas (rows independent)

    # --- operands / specs: x is M-tiled, weights & biases are full-extent VMEM
    # residents (index_map constant -> fetched once).  pipeline_mode=Buffered(1)
    # on the resident operands would be a minor VMEM cleanup only; skipped.
    operands = [x]
    in_specs = [pl.BlockSpec((tm, K0), lambda i: (i, 0))]
    for (has_bias, _), w, b in zip(layer_meta, weights, biases):
        operands.append(w)
        in_specs.append(pl.BlockSpec(w.shape, lambda i: (0, 0)))
        if has_bias:
            operands.append(b)
            in_specs.append(pl.BlockSpec(b.shape, lambda i: (0, 0)))

    # Output at its true width: last block dim equals the full array dim, which
    # is legal and avoids 8x-inflated lane-padded writeback + an extra slice.
    out = pl.pallas_call(
        _make_fused_mlp_kernel(layer_meta),
        out_shape=jax.ShapeDtypeStruct((M, n_out), x.dtype),
        grid=grid,
        in_specs=in_specs,
        out_specs=pl.BlockSpec((tm, n_out), lambda i: (i, 0)),
        compiler_params=pltpu.CompilerParams(
            dimension_semantics=("parallel",)),  # shards batch tiles across TCs
    )(*operands)

    return out


def build_mlp(layer_meta: Tuple[Tuple[bool, bool], ...],
              tile_m: int = 2048,
              compute_dtype=jnp.float32):
    """Return a cached, jitted fused-MLP callable (built once, reused)."""
    fn = functools.partial(fused_mlp_forward, layer_meta=layer_meta,
                           tile_m=tile_m, compute_dtype=compute_dtype)
    return jax.jit(fn)


def init_mlp_params(key, hidden_dims: List[int], readout: bool = False):
    """Mirror masif.utils.mlp.MLP.__init__ parameter shapes.

    Layers:
      - Linear(in,out,bias=True) + ReLU  for each (dims[:-2], dims[1:-1]) pair
      - Linear(dims[-2], dims[-1], bias=False)   (no activation)
      - if readout: extra Linear(hidden_dims[-2], hidden_dims[-1], bias=False)
    Weights are stored as (in, out) = W_pytorch.T.
    Returns (weights, biases, layer_meta).
    """
    dims = hidden_dims[:-1] if readout else hidden_dims
    weights, biases, meta = [], [], []
    for in_dim, out_dim in zip(dims[:-2], dims[1:-1]):
        key, kw, kb = jax.random.split(key, 3)
        bound = 1.0 / jnp.sqrt(in_dim)
        weights.append(jax.random.uniform(kw, (in_dim, out_dim), jnp.float32, -bound, bound))
        biases.append(jax.random.uniform(kb, (1, out_dim), jnp.float32, -bound, bound))
        meta.append((True, True))
    # final bias-free linear, no activation
    in_dim, out_dim = dims[-2], dims[-1]
    key, kw = jax.random.split(key)
    bound = 1.0 / jnp.sqrt(in_dim)
    weights.append(jax.random.uniform(kw, (in_dim, out_dim), jnp.float32, -bound, bound))
    biases.append(None)
    meta.append((False, False))
    if readout:
        in_dim, out_dim = hidden_dims[-2], hidden_dims[-1]
        key, kw = jax.random.split(key)
        bound = 1.0 / jnp.sqrt(in_dim)
        weights.append(jax.random.uniform(kw, (in_dim, out_dim), jnp.float32, -bound, bound))
        biases.append(None)
        meta.append((False, False))
    return weights, biases, tuple(meta)


def mlp_reference(x, weights, biases, layer_meta):
    """Pure-JAX reference for correctness check."""
    for (has_bias, relu), w, b in zip(layer_meta, weights, biases):
        x = jnp.dot(x, w, preferred_element_type=jnp.float32)
        if has_bias:
            x = x + b
        if relu:
            x = jnp.maximum(x, 0.0)
    return x


if __name__ == "__main__":
    key = jax.random.PRNGKey(0)
    hidden_dims = [32, 64, 48, 16]   # MLP(hidden_dims=[32,64,48,16], activation='relu')

    kp, kx1, kx2 = jax.random.split(key, 3)
    weights, biases, layer_meta = init_mlp_params(kp, hidden_dims, readout=False)

    # single fused, jitted callable (built once); large default tile_m,
    # small batches collapse to one grid step.
    forward = build_mlp(layer_meta)

    # small batch (single grid step, output emitted at its true 16-wide lane width)
    x1 = jax.random.normal(kx1, (8, hidden_dims[0]), jnp.float32)
    out1 = jax.block_until_ready(forward(x1, weights, biases))
    ref1 = mlp_reference(x1, weights, biases, layer_meta)
    assert out1.shape == (8, hidden_dims[-1]), out1.shape
    assert jnp.allclose(out1, ref1, atol=1e-5, rtol=1e-5), "mismatch vs reference (batch=8)"

    # non-multiple batch with a small tile to exercise the ragged last block
    # (grid = cdiv(200, 64) = 4; no wrapper-side pad/slice anymore)
    forward_tiled = build_mlp(layer_meta, tile_m=64)
    x2 = jax.random.normal(kx2, (200, hidden_dims[0]), jnp.float32)
    out2 = jax.block_until_ready(forward_tiled(x2, weights, biases))
    ref2 = mlp_reference(x2, weights, biases, layer_meta)
    assert out2.shape == (200, hidden_dims[-1]), out2.shape
    assert jnp.allclose(out2, ref2, atol=1e-5, rtol=1e-5), "mismatch vs reference (batch=200)"

    # bf16 matmul-input path (v6e/v7x full-rate MXU), f32 accumulation: relaxed tolerance
    forward_bf16 = build_mlp(layer_meta, compute_dtype=jnp.bfloat16)
    out3 = jax.block_until_ready(forward_bf16(x2, weights, biases))
    assert out3.shape == (200, hidden_dims[-1]), out3.shape
    assert jnp.allclose(out3, ref2, atol=2e-2, rtol=2e-2), "mismatch vs reference (bf16 path)"

    print("KERNEL_OK")
</pallas_src>

<mosaic_0001>
module attributes {stable_mosaic.version = 11 : i64} {
  func.func @kernel(%arg0: i32, %arg1: memref<8x32xf32, #tpu.memory_space<vmem>>, %arg2: memref<32x64xf32, #tpu.memory_space<vmem>>, %arg3: memref<1x64xf32, #tpu.memory_space<vmem>>, %arg4: memref<64x48xf32, #tpu.memory_space<vmem>>, %arg5: memref<1x48xf32, #tpu.memory_space<vmem>>, %arg6: memref<48x16xf32, #tpu.memory_space<vmem>>, %arg7: memref<8x16xf32, #tpu.memory_space<vmem>>) attributes {dimension_semantics = [#tpu.dimension_semantics<parallel>], iteration_bounds = array<i64: 1>, scalar_prefetch = 0 : i64, scratch_operands = 0 : i64, tpu.core_type = #tpu.core_type<tc>, window_params = [{transform_indices = @transform_0, window_bounds = array<i64: 8, 32>}, {pipeline_mode = #tpu.pipeline_mode<synchronous>, transform_indices = @transform_1, window_bounds = array<i64: 32, 64>}, {pipeline_mode = #tpu.pipeline_mode<synchronous>, transform_indices = @transform_2, window_bounds = array<i64: 1, 64>}, {pipeline_mode = #tpu.pipeline_mode<synchronous>, transform_indices = @transform_3, window_bounds = array<i64: 64, 48>}, {pipeline_mode = #tpu.pipeline_mode<synchronous>, transform_indices = @transform_4, window_bounds = array<i64: 1, 48>}, {pipeline_mode = #tpu.pipeline_mode<synchronous>, transform_indices = @transform_5, window_bounds = array<i64: 48, 16>}, {transform_indices = @transform_6, window_bounds = array<i64: 8, 16>}]} {
    %c0 = arith.constant 0 : index
    %c0_0 = arith.constant 0 : index
    %0 = vector.load %arg1[%c0, %c0_0] : memref<8x32xf32, #tpu.memory_space<vmem>>, vector<8x32xf32>
    %c0_1 = arith.constant 0 : index
    %c0_2 = arith.constant 0 : index
    %1 = vector.load %arg2[%c0_1, %c0_2] : memref<32x64xf32, #tpu.memory_space<vmem>>, vector<32x64xf32>
    %cst = arith.constant dense<0.000000e+00> : vector<8x64xf32>
    %2 = tpu.matmul %0, %1, %cst {dimension_numbers = #tpu.dot_dimension_numbers<[1], [0], [0], [1], [0, 0, 1, 1], [], []>} : vector<8x32xf32>, vector<32x64xf32>, vector<8x64xf32> -> vector<8x64xf32>
    %c0_3 = arith.constant 0 : index
    %c0_4 = arith.constant 0 : index
    %3 = vector.load %arg3[%c0_3, %c0_4] : memref<1x64xf32, #tpu.memory_space<vmem>>, vector<1x64xf32>
    %4 = vector.broadcast %3 : vector<1x64xf32> to vector<8x64xf32>
    %5 = arith.addf %2, %4 : vector<8x64xf32>
    %cst_5 = arith.constant 0.000000e+00 : f32
    %6 = vector.broadcast %cst_5 : f32 to vector<8x64xf32>
    %7 = arith.maximumf %5, %6 : vector<8x64xf32>
    %c0_6 = arith.constant 0 : index
    %c0_7 = arith.constant 0 : index
    %8 = vector.load %arg4[%c0_6, %c0_7] : memref<64x48xf32, #tpu.memory_space<vmem>>, vector<64x48xf32>
    %cst_8 = arith.constant dense<0.000000e+00> : vector<8x48xf32>
    %9 = tpu.matmul %7, %8, %cst_8 {dimension_numbers = #tpu.dot_dimension_numbers<[1], [0], [0], [1], [0, 0, 1, 1], [], []>} : vector<8x64xf32>, vector<64x48xf32>, vector<8x48xf32> -> vector<8x48xf32>
    %c0_9 = arith.constant 0 : index
    %c0_10 = arith.constant 0 : index
    %10 = vector.load %arg5[%c0_9, %c0_10] : memref<1x48xf32, #tpu.memory_space<vmem>>, vector<1x48xf32>
    %11 = vector.broadcast %10 : vector<1x48xf32> to vector<8x48xf32>
    %12 = arith.addf %9, %11 : vector<8x48xf32>
    %cst_11 = arith.constant 0.000000e+00 : f32
    %13 = vector.broadcast %cst_11 : f32 to vector<8x48xf32>
    %14 = arith.maximumf %12, %13 : vector<8x48xf32>
    %c0_12 = arith.constant 0 : index
    %c0_13 = arith.constant 0 : index
    %15 = vector.load %arg6[%c0_12, %c0_13] : memref<48x16xf32, #tpu.memory_space<vmem>>, vector<48x16xf32>
    %cst_14 = arith.constant dense<0.000000e+00> : vector<8x16xf32>
    %16 = tpu.matmul %14, %15, %cst_14 {dimension_numbers = #tpu.dot_dimension_numbers<[1], [0], [0], [1], [0, 0, 1, 1], [], []>} : vector<8x48xf32>, vector<48x16xf32>, vector<8x16xf32> -> vector<8x16xf32>
    %c0_15 = arith.constant 0 : index
    %c0_16 = arith.constant 0 : index
    %17 = vector.load %arg7[%c0_15, %c0_16] : memref<8x16xf32, #tpu.memory_space<vmem>>, vector<8x16xf32>
    tpu.vector_store %arg7[%c0_15, %c0_16], %16 {strides = array<i32>} : memref<8x16xf32, #tpu.memory_space<vmem>>, vector<8x16xf32>,
    return
  }
  func.func @transform_0(%arg0: i32) -> (i32, i32) {
    %c0_i32 = arith.constant 0 : i32
    %c0_i32_0 = arith.constant 0 : i32
    return %arg0, %c0_i32 : i32, i32
  }
  func.func @transform_1(%arg0: i32) -> (i32, i32) {
    %c0_i32 = arith.constant 0 : i32
    %c0_i32_0 = arith.constant 0 : i32
    %c0_i32_1 = arith.constant 0 : i32
    return %c0_i32, %c0_i32_0 : i32, i32
  }
  func.func @transform_2(%arg0: i32) -> (i32, i32) {
    %c0_i32 = arith.constant 0 : i32
    %c0_i32_0 = arith.constant 0 : i32
    %c0_i32_1 = arith.constant 0 : i32
    return %c0_i32, %c0_i32_0 : i32, i32
  }
  func.func @transform_3(%arg0: i32) -> (i32, i32) {
    %c0_i32 = arith.constant 0 : i32
    %c0_i32_0 = arith.constant 0 : i32
    %c0_i32_1 = arith.constant 0 : i32
    return %c0_i32, %c0_i32_0 : i32, i32
  }
  func.func @transform_4(%arg0: i32) -> (i32, i32) {
    %c0_i32 = arith.constant 0 : i32
    %c0_i32_0 = arith.constant 0 : i32
    %c0_i32_1 = arith.constant 0 : i32
    return %c0_i32, %c0_i32_0 : i32, i32
  }
  func.func @transform_5(%arg0: i32) -> (i32, i32) {
    %c0_i32 = arith.constant 0 : i32
    %c0_i32_0 = arith.constant 0 : i32
    %c0_i32_1 = arith.constant 0 : i32
    return %c0_i32, %c0_i32_0 : i32, i32
  }
  func.func @transform_6(%arg0: i32) -> (i32, i32) {
    %c0_i32 = arith.constant 0 : i32
    %c0_i32_0 = arith.constant 0 : i32
    return %arg0, %c0_i32 : i32, i32
  }
}

</mosaic_0001>

<llo_original>
// kernel: fused_mlp_forward.1
$region0: #{fused_mlp_forward.1}
  #allocation0 [shape = 'u32[]', space=smem, size = 0x4, offset = 0x4, fixed_abs, tag = 'smem constant byte address 0x4 - core index']
  #allocation1 [shape = 'u32[72,128]{1,0:T(1,128)}', space=vmem, size = 0x9000, scoped, tag = 'internal scratch']
  %s0 = inlined_call_operand.vmem [shape: f32[8,32], index: 0, kind: input, shape index: {}]
  %s1 = inlined_call_operand.vmem [shape: f32[32,64], index: 1, kind: input, shape index: {}]
  %s2 = inlined_call_operand.vmem [shape: f32[1,64], index: 2, kind: input, shape index: {}]
  %s3 = inlined_call_operand.vmem [shape: f32[64,48], index: 3, kind: input, shape index: {}]
  %s4 = inlined_call_operand.vmem [shape: f32[1,48], index: 4, kind: input, shape index: {}]
  %s5 = inlined_call_operand.vmem [shape: f32[48,16], index: 5, kind: input, shape index: {}]
  %s6 = inlined_call_operand.hbm [shape: f32[8,16], index: 6, kind: output, shape index: {}]
  %s7 = sld [smem:[#allocation0]]
  $region34: #{fused_mlp_forward.1} parent=0
    _
  %s9 = ssub.s32 1, %s7
  %s10 = scalar_select 0, %s9, %s7
  $region1: #{fused_mlp_forward.1} parent=0
    #allocation2 [shape = 'u8[4096]{0}', space=vmem, size = 0x1000, scoped, tag = 'output window, operand 0, single buffered']
    #allocation3 [shape = 's32[1]{0}', space=sflag, size = 0x4, scoped, tag = 'scoped memory for fused_mlp_forward.1']
    %11 = vsyncpa [#allocation3], 0
    // Predicated region
    $region2: #{fused_mlp_forward.1} parent=1 // pred_check
      _
    $region3: #{fused_mlp_forward.1} parent=1 // pred_check_branch
      %13 = sbr.rel (0) target = $region5
    $region4: #{fused_mlp_forward.1} parent=1 // pred_region
      _
    $region5: #{fused_mlp_forward.1} parent=1 // pred_fallthru
      _
    // Predicated region
    $region6: #{fused_mlp_forward.1} parent=1 // pred_check
      _
    $region7: #{fused_mlp_forward.1} parent=1 // pred_check_branch
      %15 = sbr.rel (0) target = $region9
    $region8: #{fused_mlp_forward.1} parent=1 // pred_region
      _
    $region9: #{fused_mlp_forward.1} parent=1 // pred_fallthru
      _
    // Predicated region
    $region10: #{fused_mlp_forward.1} parent=1 // pred_check
      _
    $region11: #{fused_mlp_forward.1} parent=1 // pred_check_branch
      %17 = sbr.rel (0) target = $region13
    $region12: #{fused_mlp_forward.1} parent=1 // pred_region
      _
    $region13: #{fused_mlp_forward.1} parent=1 // pred_fallthru
      _
    // Predicated region
    $region14: #{fused_mlp_forward.1} parent=1 // pred_check
      _
    $region15: #{fused_mlp_forward.1} parent=1 // pred_check_branch
      %19 = sbr.rel (0) target = $region17
    $region16: #{fused_mlp_forward.1} parent=1 // pred_region
      _
    $region17: #{fused_mlp_forward.1} parent=1 // pred_fallthru
      _
    // Predicated region
    $region18: #{fused_mlp_forward.1} parent=1 // pred_check
      _
    $region19: #{fused_mlp_forward.1} parent=1 // pred_check_branch
      %21 = sbr.rel (0) target = $region21
    $region20: #{fused_mlp_forward.1} parent=1 // pred_region
      _
    $region21: #{fused_mlp_forward.1} parent=1 // pred_fallthru
      _
    // Predicated region
    $region22: #{fused_mlp_forward.1} parent=1 // pred_check
      _
    $region23: #{fused_mlp_forward.1} parent=1 // pred_check_branch
      %23 = sbr.rel (0) target = $region25
    $region24: #{fused_mlp_forward.1} parent=1 // pred_region
      _
    $region25: #{fused_mlp_forward.1} parent=1 // pred_fallthru
      _
    %v24 = vld [vmem:[%s0] sm:$0xff]
    %v25 = vld [vmem:[%s1] sm:$0xff]
    %v26 = vld [vmem:[%s1 + $0x8] sm:$0xff]
    %v27 = vld [vmem:[%s1 + $0x10] sm:$0xff]
    %v28 = vld [vmem:[%s1 + $0x18] sm:$0xff]
    %v29 = vld [vmem:[%s2] sm:$0x1]
    %v31 = vperm.slane %v29, 0
    %vm33 = vcmask 261120
    %v35 = vsel %vm33, %v24, 0
    %37 = vmatpush.msra.mxu0 0.0
    %38 = vmatpush.msra.mxu0 0.0
    %39 = vmatpush.msra.mxu0 0.0
    %40 = vmatpush.msra.mxu0 0.0
    %41 = vmatpush.msra.mxu0 0.0
    %42 = vmatpush.msra.mxu0 0.0
    %43 = vmatpush.msra.mxu0 0.0
    %44 = vmatpush.msra.mxu0 0.0
    %45 = vmatpush.msra.mxu0 0.0
    %46 = vmatpush.msra.mxu0 0.0
    %47 = vmatpush.msra.mxu0 0.0
    %48 = vmatpush.msra.mxu0 0.0
    %49 = vmatpush.msra.mxu0 %v28
    %50 = vmatpush.msra.mxu0 %v27
    %51 = vmatpush.msra.mxu0 %v26
    %52 = vmatpush.msra.mxu0 %v25
    %53 = vmatmul.f32.gmra.mxu0 %v35
    %v54 = vpop.f32.mrf.mxu0
    %v55 = vadd.f32 %v31, %v54
    %56 = vdwg.mxu0
    %v57 = vmax.f32 %v55, 0.0
    %v58 = vld [vmem:[%s3] sm:$0xff]
    %v59 = vld [vmem:[%s3 + $0x8] sm:$0xff]
    %v60 = vld [vmem:[%s3 + $0x10] sm:$0xff]
    %v61 = vld [vmem:[%s3 + $0x18] sm:$0xff]
    %v62 = vld [vmem:[%s3 + $0x20] sm:$0xff]
    %v63 = vld [vmem:[%s3 + $0x28] sm:$0xff]
    %v64 = vld [vmem:[%s3 + $0x30] sm:$0xff]
    %v65 = vld [vmem:[%s3 + $0x38] sm:$0xff]
    %v66 = vld [vmem:[%s4] sm:$0x1]
    %v68 = vperm.slane %v66, 0
    %vm70 = vcmask 523264
    %v72 = vsel %vm70, %v57, 0
    %74 = vmatpush.msra.mxu0 0.0
    %75 = vmatpush.msra.mxu0 0.0
    %76 = vmatpush.msra.mxu0 0.0
    %77 = vmatpush.msra.mxu0 0.0
    %78 = vmatpush.msra.mxu0 0.0
    %79 = vmatpush.msra.mxu0 0.0
    %80 = vmatpush.msra.mxu0 0.0
    %81 = vmatpush.msra.mxu0 0.0
    %82 = vmatpush.msra.mxu0 %v65
    %83 = vmatpush.msra.mxu0 %v64
    %84 = vmatpush.msra.mxu0 %v63
    %85 = vmatpush.msra.mxu0 %v62
    %86 = vmatpush.msra.mxu0 %v61
    %87 = vmatpush.msra.mxu0 %v60
    %88 = vmatpush.msra.mxu0 %v59
    %89 = vmatpush.msra.mxu0 %v58
    %90 = vmatmul.f32.gmra.mxu0 %v72
    %v91 = vpop.f32.mrf.mxu0
    %v92 = vadd.f32 %v68, %v91
    %93 = vdwg.mxu0
    %v94 = vmax.f32 %v92, 0.0
    %v95 = vld [vmem:[%s5] sm:$0xff]
    %v96 = vld [vmem:[%s5 + $0x8] sm:$0xff]
    %v97 = vld [vmem:[%s5 + $0x10] sm:$0xff]
    %v98 = vld [vmem:[%s5 + $0x18] sm:$0xff]
    %v99 = vld [vmem:[%s5 + $0x20] sm:$0xff]
    %v100 = vld [vmem:[%s5 + $0x28] sm:$0xff]
    %vm101 = vcmask 392192
    %v103 = vsel %vm101, %v94, 0
    %105 = vmatpush.msra.mxu0 0.0
    %106 = vmatpush.msra.mxu0 0.0
    %107 = vmatpush.msra.mxu0 0.0
    %108 = vmatpush.msra.mxu0 0.0
    %109 = vmatpush.msra.mxu0 0.0
    %110 = vmatpush.msra.mxu0 0.0
    %111 = vmatpush.msra.mxu0 0.0
    %112 = vmatpush.msra.mxu0 0.0
    %113 = vmatpush.msra.mxu0 0.0
    %114 = vmatpush.msra.mxu0 0.0
    %115 = vmatpush.msra.mxu0 %v100
    %116 = vmatpush.msra.mxu0 %v99
    %117 = vmatpush.msra.mxu0 %v98
    %118 = vmatpush.msra.mxu0 %v97
    %119 = vmatpush.msra.mxu0 %v96
    %120 = vmatpush.msra.mxu0 %v95
    %121 = vmatmul.f32.gmra.mxu0 %v103
    %v122 = vpop.f32.mrf.mxu0
    %v123 = vadd.f32 0.0, %v122
    %124 = vdwg.mxu0
    %vm125 = vcmask 130048
    %126 = vst.msk [vmem:[#allocation2] sm:$0xff] %vm125, %v123
    // Predicated region
    $region26: #{fused_mlp_forward.1} parent=1 // pred_check
      _
    $region27: #{fused_mlp_forward.1} parent=1 // pred_check_branch
      %128 = sbr.rel (0) target = $region29
    $region28: #{fused_mlp_forward.1} parent=1 // pred_region
      %130 = vsyncadd [#allocation3], 0
      %s132 = sshll.u32 [#allocation2], 4
      %s133 = int_to_ptr.vmem [resolvable:$true] %s132
      %s134 = sshll.u32 %s6, 4
      %s135 = int_to_ptr.hbm [resolvable:$true] %s134
      %137 = dma.vmem_to_hbm [thread:$0]  %s133, 128, %s135, [#allocation3]
    $region29: #{fused_mlp_forward.1} parent=1 // pred_fallthru
      _
    // Predicated region
    $region30: #{fused_mlp_forward.1} parent=1 // pred_check
      _
    $region31: #{fused_mlp_forward.1} parent=1 // pred_check_branch
      %139 = sbr.rel (0) target = $region33
    $region32: #{fused_mlp_forward.1} parent=1 // pred_region
      %141 = dma.done [#allocation3], 128
    $region33: #{fused_mlp_forward.1} parent=1 // pred_fallthru
      _
    %142 = vsyncpa [#allocation3], 1

</llo_original>
